<compile_context>
chip_gen: v5e
topology: v5e:2x2
jax: 0.10.0
libtpu: 0.0.40
codegen_flags: <defaults>
</compile_context>

<pallas_src>
import math

import jax
import jax.numpy as jnp
from jax.experimental import pallas as pl
from jax.experimental.pallas import tpu as pltpu

_MIB = 1024 * 1024
_SMALL_BYPASS_BYTES = 1 * _MIB  # below this, a fused XLA add is strictly faster than a kernel


def _build_pe_table(dim: int, max_len: int) -> jnp.ndarray:
    """Deterministic sinusoidal PE table, shape [max_len, dim] (matches the nn buffer pe[0])."""
    position = jnp.arange(max_len, dtype=jnp.float32)[:, None]                 # [max_len, 1]
    div_term = jnp.exp(jnp.arange(0, dim, 2, dtype=jnp.float32)
                       * (-math.log(10000.0) / dim))                           # [dim//2]
    pe = jnp.zeros((max_len, dim), dtype=jnp.float32)
    pe = pe.at[:, 0::2].set(jnp.sin(position * div_term))
    pe = pe.at[:, 1::2].set(jnp.cos(position * div_term))
    return pe


def _pe_add_kernel(x_ref, pe_ref, o_ref):
    # x_ref/o_ref: [1, TL, Dp]; pe_ref: [TL, Dp] (broadcasts over the leading batch dim of 1).
    o_ref[...] = (x_ref[...] + pe_ref[...]).astype(o_ref.dtype)


def _sublane(dtype) -> int:
    """Sublane packing multiple for a dtype: 8 for 4-byte, 16 for 2-byte, 32 for 1-byte."""
    return max(8, 32 // jnp.dtype(dtype).itemsize)


def _factor_lane_dense(L: int, D: int, sublane: int):
    """Pick (Lp, Dp) with Lp*Dp == L*D, Dp a multiple of 128, preferring sublane-aligned Lp."""
    if D % 128 == 0:
        return L, D
    total = L * D
    if total % 128 == 0:
        cands = [c for c in (1024, 512, 256, 128) if total % c == 0]
        # 1st choice: Lp a sublane multiple (full vreg density on loads and stores).
        for c in cands:
            if (total // c) % sublane == 0:
                return total // c, c
        # 2nd choice: Lp at least one full sublane group.
        for c in cands:
            if (total // c) >= sublane:
                return total // c, c
        # 3rd choice: any lane-dense factoring (tiny planes).
        if cands:
            return total // cands[0], cands[0]
    # Awkward shape (D and L*D not multiples of 128): keep (L, D) full-extent blocks.
    # NOTE: last dim < 128 here emits masked stores (vst.msk); such shapes are rare/small and
    # usually taken by the pure-JAX small-input bypass instead.
    return L, D


def _pick_seq_tile(Lp: int, Dp: int, itemsize: int, sublane: int, target_bytes: int) -> int:
    """Sublane-aligned row count giving ~target_bytes per block; grid uses cdiv (ragged OK)."""
    if Lp <= sublane:
        return Lp                                   # full extent (always a legal block dim)
    rows = target_bytes // max(1, Dp * itemsize)
    rows = max(sublane, min(rows, Lp))
    rows -= rows % sublane                          # keep (sublane, 128)-packed tiles
    return rows


def _vmem_plan():
    """(block byte target, vmem_limit_bytes) gated on the chip's physical VMEM."""
    try:
        cap = int(pltpu.get_tpu_info().vmem_capacity_bytes)
    except Exception:
        cap = 64 * _MIB                              # conservative (v7x-sized) default
    if cap >= 100 * _MIB:                            # v5e / v6e: 128 MiB physical
        return 4 * _MIB, 48 * _MIB                   # 3 arrays x 2 bufs x 4 MiB = 24 MiB << 48 MiB
    return 2 * _MIB, 32 * _MIB                       # v7x: 64 MiB per TC; 12 MiB footprint


class PositionalEncoding:
    """JAX/Pallas analog of the PyTorch module (p=0 dropout => identity)."""

    def __init__(self, dim: int, max_len: int, do_prob: float = 0.0):
        assert dim % 2 == 0, "sinusoidal PE requires an even model dimension"
        self.dim = dim
        self.max_len = max_len
        self.do_prob = do_prob                      # TODO(synk): dropout masking for p > 0
        self.pe = _build_pe_table(dim, max_len)     # f32 [max_len, dim]
        self._pe_cache = {}                         # (L, dtype, Lp, Dp) -> reshaped/cast PE plane

    def _pe_plane(self, L, dtype, Lp, Dp):
        key = (L, jnp.dtype(dtype).name, Lp, Dp)
        if key not in self._pe_cache:
            # Hoisted out of the hot path: slice + cast + reshape happen once per (L, dtype).
            # (For sub-f32 dtypes the add happens in that dtype; ~1 ulp deviation vs f32 buffer.)
            self._pe_cache[key] = self.pe[:L, :].astype(dtype).reshape(Lp, Dp)
        return self._pe_cache[key]

    def __call__(self, x: jnp.ndarray, *, min_kernel_bytes: int = _SMALL_BYPASS_BYTES):
        B, L, D = x.shape
        if D != self.dim:
            raise ValueError(f"dim mismatch: {D} vs {self.dim}")
        if L > self.max_len:
            raise ValueError(f"sequence length {L} exceeds max_len {self.max_len}")

        itemsize = jnp.dtype(x.dtype).itemsize
        if B * L * D * itemsize < min_kernel_bytes:
            # Tiny input: a single fused XLA add beats kernel launch + pipeline ramp.
            return x + self.pe[None, :L, :].astype(x.dtype)

        sub = _sublane(x.dtype)
        Lp, Dp = _factor_lane_dense(L, D, sub)
        block_bytes, vmem_limit = _vmem_plan()
        TL = _pick_seq_tile(Lp, Dp, itemsize, sub, block_bytes)

        x2 = x.reshape(B, Lp, Dp)
        pe2 = self._pe_plane(L, x.dtype, Lp, Dp)

        out = pl.pallas_call(
            _pe_add_kernel,
            out_shape=jax.ShapeDtypeStruct((B, Lp, Dp), x.dtype),
            grid_spec=pltpu.PrefetchScalarGridSpec(
                num_scalar_prefetch=0,
                # Batch innermost: the PE block index is constant across b, so the PE tile is
                # not re-fetched for every batch element.  cdiv handles a ragged last L-tile.
                grid=(pl.cdiv(Lp, TL), B),
                in_specs=[
                    pl.BlockSpec((1, TL, Dp), lambda l, b: (b, l, 0)),   # activation tile
                    pl.BlockSpec((TL, Dp),    lambda l, b: (l, 0)),      # PE tile (b-independent)
                ],
                out_specs=pl.BlockSpec((1, TL, Dp), lambda l, b: (b, l, 0)),
            ),
            # Reuse x's HBM buffer when it is donated upstream (no extra allocation).
            input_output_aliases={0: 0},
            compiler_params=pltpu.CompilerParams(
                dimension_semantics=("parallel", "parallel"),
                vmem_limit_bytes=vmem_limit,
            ),
        )(x2, pe2)

        return out.reshape(B, L, D)


if __name__ == "__main__":
    # Small shapes consistent with the module's forward: x is [B, L, dim].
    B, L, DIM, MAX_LEN = 2, 8, 32, 16

    key = jax.random.PRNGKey(0)
    k0, k1 = jax.random.split(key)
    x = jax.random.normal(k0, (B, L, DIM), dtype=jnp.float32)

    mod = PositionalEncoding(DIM, MAX_LEN)
    ref = x + mod.pe[None, :L, :]

    # 1) Default path: tiny input takes the fused-XLA bypass.
    out_bypass = jax.block_until_ready(mod(x))
    assert out_bypass.shape == (B, L, DIM)
    assert jnp.allclose(out_bypass, ref, atol=1e-6), "bypass path mismatch vs reference"

    # 2) Force the Pallas kernel on the same tiny shape (exercises full-extent small blocks).
    out_kernel = jax.block_until_ready(mod(x, min_kernel_bytes=0))
    assert jnp.allclose(out_kernel, ref, atol=1e-6), "kernel path mismatch vs reference"

    # 3) Exercise lane-dense flattening + ragged cdiv grid (still small: ~100 KiB).
    B2, L2, D2, MAX2 = 2, 200, 64, 256
    mod2 = PositionalEncoding(D2, MAX2)
    x2 = jax.random.normal(k1, (B2, L2, D2), dtype=jnp.float32)
    out2 = jax.block_until_ready(mod2(x2, min_kernel_bytes=0))
    ref2 = x2 + mod2.pe[None, :L2, :]
    assert jnp.allclose(out2, ref2, atol=1e-6), "ragged-tile kernel mismatch vs reference"

    print("KERNEL_OK")
</pallas_src>

<mosaic_0001>
module attributes {stable_mosaic.version = 11 : i64} {
  func.func @_pe_add_kernel(%arg0: i32, %arg1: i32, %arg2: memref<1x1x256xf32, #tpu.memory_space<vmem>>, %arg3: memref<1x256xf32, #tpu.memory_space<vmem>>, %arg4: memref<1x1x256xf32, #tpu.memory_space<vmem>>) attributes {dimension_semantics = [#tpu.dimension_semantics<parallel>, #tpu.dimension_semantics<parallel>], iteration_bounds = array<i64: 1, 2>, scalar_prefetch = 0 : i64, scratch_operands = 0 : i64, tpu.core_type = #tpu.core_type<tc>, window_params = [{transform_indices = @transform_0, window_bounds = array<i64: 1, 1, 256>}, {transform_indices = @transform_1, window_bounds = array<i64: 1, 256>}, {transform_indices = @transform_2, window_bounds = array<i64: 1, 1, 256>}]} {
    %c0 = arith.constant 0 : index
    %c0_0 = arith.constant 0 : index
    %c0_1 = arith.constant 0 : index
    %0 = vector.load %arg2[%c0, %c0_0, %c0_1] : memref<1x1x256xf32, #tpu.memory_space<vmem>>, vector<1x1x256xf32>
    %c0_2 = arith.constant 0 : index
    %c0_3 = arith.constant 0 : index
    %1 = vector.load %arg3[%c0_2, %c0_3] : memref<1x256xf32, #tpu.memory_space<vmem>>, vector<1x256xf32>
    %2 = vector.shape_cast %1 : vector<1x256xf32> to vector<1x1x256xf32>
    %3 = arith.addf %0, %2 : vector<1x1x256xf32>
    %c0_4 = arith.constant 0 : index
    %c0_5 = arith.constant 0 : index
    %c0_6 = arith.constant 0 : index
    %4 = vector.load %arg4[%c0_4, %c0_5, %c0_6] : memref<1x1x256xf32, #tpu.memory_space<vmem>>, vector<1x1x256xf32>
    tpu.vector_store %arg4[%c0_4, %c0_5, %c0_6], %3 {strides = array<i32>} : memref<1x1x256xf32, #tpu.memory_space<vmem>>, vector<1x1x256xf32>,
    return
  }
  func.func @transform_0(%arg0: i32, %arg1: i32) -> (i32, i32, i32) {
    %c0_i32 = arith.constant 0 : i32
    %c0_i32_0 = arith.constant 0 : i32
    return %arg1, %arg0, %c0_i32 : i32, i32, i32
  }
  func.func @transform_1(%arg0: i32, %arg1: i32) -> (i32, i32) {
    %c0_i32 = arith.constant 0 : i32
    %c0_i32_0 = arith.constant 0 : i32
    return %arg0, %c0_i32 : i32, i32
  }
  func.func @transform_2(%arg0: i32, %arg1: i32) -> (i32, i32, i32) {
    %c0_i32 = arith.constant 0 : i32
    %c0_i32_0 = arith.constant 0 : i32
    return %arg1, %arg0, %c0_i32 : i32, i32, i32
  }
}

</mosaic_0001>

<llo_original>
// kernel: tpu_custom_call.1
$region0: #{tpu_custom_call.1}
  #allocation0 [shape = 'u32[]', space=smem, size = 0x4, offset = 0x4, fixed_abs, tag = 'smem constant byte address 0x4 - core index']
  #allocation1 [shape = 'u32[72,128]{1,0:T(1,128)}', space=vmem, size = 0x9000, scoped, tag = 'internal scratch']
  %s0 = inlined_call_operand.hbm [shape: f32[2,1,256], index: 0, kind: input, shape index: {}, may-alias: {0,2}]
  %s1 = inlined_call_operand.vmem [shape: f32[1,256], index: 1, kind: input, shape index: {}]
  %s2 = inlined_call_operand.hbm [shape: f32[2,1,256], index: 2, kind: output, shape index: {}, may-alias: {0,2}]
  %s3 = sld [smem:[#allocation0]]
  $region45: #{tpu_custom_call.1} parent=0
    _
  %s5 = ssub.s32 1, %s3
  %s6 = scalar_select 0, %s5, %s3
  $region1: #{tpu_custom_call.1} parent=0
    #allocation2 [shape = 'u8[2048]{0}', space=vmem, size = 0x800, scoped, tag = 'input window, operand 0']
    #allocation3 [shape = 's32[2]{0}', space=sflag, size = 0x8, scoped, tag = 'scoped memory for tpu_custom_call.1']
    #allocation4 [shape = 's32[2]{0}', space=sflag, size = 0x8, scoped, tag = 'scoped memory for tpu_custom_call.1']
    #allocation5 [shape = 'u8[2048]{0}', space=vmem, size = 0x800, scoped, tag = 'output window, operand 0']
    %7 = vsyncpa [#allocation3], 0
    %s8 = scalar_lea.sflag [#allocation3], 1
    %9 = vsyncpa %s8, 0
    %10 = vsyncpa [#allocation4], 0
    %s11 = scalar_lea.sflag [#allocation4], 1
    %12 = vsyncpa %s11, 0
    loop: start=0, step=1, limit=4
    $region2: #{tpu_custom_call.1} parent=1 // loop_pre_header
      _
    $region3: #{tpu_custom_call.1} parent=1 // loop_header
      %s14 = sphi 0, %s18
      %p15 = scmp.ge.s32.totalorder %s14, 4
      %s21 = sphi 0, %s33
      %s22 = sphi 0, %s29
      %s23 = sphi 0, %s21
      %s24 = sphi 0, %s22
      %s25 = sphi 0, %s23
      %s26 = sphi 0, %s24
      %s38 = sphi 0, %s40
      %s41 = sphi 0, %s38
      %s42 = sphi 0, %s41
      %s58 = sphi 0, %s42
      %s64 = sphi 0, %s66
      %s67 = sphi 0, %s64
      %s68 = sphi 0, %s67
      %s84 = sphi 0, %s68
      %s92 = sphi 0, %s94
      %s95 = sphi 0, %s92
      %s96 = sphi 0, %s95
      %s112 = sphi 0, %s96
    $region4: #{tpu_custom_call.1} parent=1 // loop_header_branch
      %17 = sbr.rel (%p15) target = $region8
    $region5: #{tpu_custom_call.1} parent=1 // loop_body
      %s19 = ssub.s32 %s14, 1
      %s20 = ssub.s32 %s14, 2
      %s27 = sadd.s32 1, %s22
      %p28 = scmp.ge.s32.totalorder %s27, 2
      %s29 = scalar_select %p28, 0, %s27
      %s30 = sadd.s32 1, %s21
      %s31 = scalar_select %p28, %s30, %s21
      %p32 = scmp.ge.s32.totalorder %s31, 1
      %s33 = scalar_select %p32, 0, %s31
      %s34 = ssub.s32 %s22, %s29
      %s35 = ssub.s32 %s21, %s33
      %s36 = sor.u32 %s34, %s35
      %p37 = scmp.eq.s32.totalorder %s36, 0
      %s39 = sadd.s32 %s38, 1
      %s40 = scalar_select %p37, %s38, %s39
      %p43 = pneg %p37
      %p44 = scmp.eq.s32.totalorder %s14, 1
      %p45 = por %p43, %p44
      %p46 = scmp.ne.s32.totalorder %s38, %s41
      %p47 = scmp.eq.s32.totalorder %s14, 0
      %p48 = por %p46, %p47
      %p49 = scmp.ne.s32.totalorder %s38, %s41
      %p50 = scmp.eq.s32.totalorder %s19, 1
      %p51 = por %p49, %p50
      %p52 = scmp.ne.s32.totalorder %s41, %s42
      %p53 = scmp.eq.s32.totalorder %s19, 0
      %p54 = por %p52, %p53
      %p55 = scmp.ne.s32.totalorder %s41, %s42
      %p56 = scmp.eq.s32.totalorder %s20, 1
      %p57 = por %p55, %p56
      %p59 = scmp.ne.s32.totalorder %s42, %s58
      %p60 = scmp.eq.s32.totalorder %s20, 0
      %p61 = por %p59, %p60
      %s62 = ssub.s32 %s21, %s33
      %p63 = scmp.eq.s32.totalorder %s62, 0
      %s65 = sadd.s32 %s64, 1
      %s66 = scalar_select %p63, %s64, %s65
      %p69 = pneg %p63
      %p70 = scmp.eq.s32.totalorder %s14, 1
      %p71 = por %p69, %p70
      %p72 = scmp.ne.s32.totalorder %s64, %s67
      %p73 = scmp.eq.s32.totalorder %s14, 0
      %p74 = por %p72, %p73
      %p75 = scmp.ne.s32.totalorder %s64, %s67
      %p76 = scmp.eq.s32.totalorder %s19, 1
      %p77 = por %p75, %p76
      %p78 = scmp.ne.s32.totalorder %s67, %s68
      %p79 = scmp.eq.s32.totalorder %s19, 0
      %p80 = por %p78, %p79
      %p81 = scmp.ne.s32.totalorder %s67, %s68
      %p82 = scmp.eq.s32.totalorder %s20, 1
      %p83 = por %p81, %p82
      %p85 = scmp.ne.s32.totalorder %s68, %s84
      %p86 = scmp.eq.s32.totalorder %s20, 0
      %p87 = por %p85, %p86
      %s88 = ssub.s32 %s22, %s29
      %s89 = ssub.s32 %s21, %s33
      %s90 = sor.u32 %s88, %s89
      %p91 = scmp.eq.s32.totalorder %s90, 0
      %s93 = sadd.s32 %s92, 1
      %s94 = scalar_select %p91, %s92, %s93
      %p97 = pneg %p91
      %p98 = scmp.eq.s32.totalorder %s14, 1
      %p99 = por %p97, %p98
      %p100 = scmp.ne.s32.totalorder %s92, %s95
      %p101 = scmp.eq.s32.totalorder %s14, 0
      %p102 = por %p100, %p101
      %p103 = scmp.ne.s32.totalorder %s92, %s95
      %p104 = scmp.eq.s32.totalorder %s19, 1
      %p105 = por %p103, %p104
      %p106 = scmp.ne.s32.totalorder %s95, %s96
      %p107 = scmp.eq.s32.totalorder %s19, 0
      %p108 = por %p106, %p107
      %p109 = scmp.ne.s32.totalorder %s95, %s96
      %p110 = scmp.eq.s32.totalorder %s20, 1
      %p111 = por %p109, %p110
      %p113 = scmp.ne.s32.totalorder %s96, %s112
      %p114 = scmp.eq.s32.totalorder %s20, 0
      %p115 = por %p113, %p114
      %p116 = scmp.le.s32.totalorder 1, %s14
      %p117 = scmp.lt.s32.totalorder %s14, 3
      %p118 = pnand %p116, %p117
      %p119 = pneg %p118
      // Predicated region
      $region9: #{tpu_custom_call.1} parent=5 // pred_check
        _
      $region10: #{tpu_custom_call.1} parent=5 // pred_check_branch
        %121 = sbr.rel (%p118) target = $region12
      $region11: #{tpu_custom_call.1} parent=5 // pred_region
        %s122 = ssub.s32 %s14, 1
        // Predicated region
        $region13: #{tpu_custom_call.1} parent=11 // pred_check
          %p123 = pneg %p80
        $region14: #{tpu_custom_call.1} parent=11 // pred_check_branch
          %125 = sbr.rel (%p123) target = $region16
        $region15: #{tpu_custom_call.1} parent=11 // pred_region
          %p126 = scmp.lt.s32.totalorder %s23, 0
          %s127 = scalar_select %p126, %s23, 0
          %s128 = smul.addr %s127, 2
          %s129 = scalar_lea.vmem %s1, %s128
        $region16: #{tpu_custom_call.1} parent=11 // pred_fallthru
          _
      $region12: #{tpu_custom_call.1} parent=5 // pred_fallthru
        _
      %p130 = scmp.lt.s32.totalorder %s14, 2
      // Predicated region
      $region17: #{tpu_custom_call.1} parent=5 // pred_check
        %p131 = pneg %p130
      $region18: #{tpu_custom_call.1} parent=5 // pred_check_branch
        %133 = sbr.rel (%p131) target = $region20
      $region19: #{tpu_custom_call.1} parent=5 // pred_region
        // Predicated region
        $region21: #{tpu_custom_call.1} parent=19 // pred_check
          %p134 = pneg %p48
        $region22: #{tpu_custom_call.1} parent=19 // pred_check_branch
          %136 = sbr.rel (%p134) target = $region24
        $region23: #{tpu_custom_call.1} parent=19 // pred_region
          %s137 = sand.u32 %s38, 1
          %s138 = scalar_lea.sflag [#allocation3], %s137
          %s139 = sand.u32 %s38, 1
          %s140 = smul.addr %s139, 2
          %s141 = scalar_lea.vmem [#allocation2], %s140
          %143 = vsyncadd %s138, 0
          %s144 = smul.addr %s21, 2
          %s145 = smul.addr %s22, 2
          %s146 = sadd.s32 %s144, %s145
          %s147 = scalar_lea.hbm %s0, %s146
          %s149 = sshll.u32 %s147, 4
          %s150 = int_to_ptr.hbm [resolvable:$true] %s149
          %s151 = sshll.u32 %s141, 4
          %s152 = int_to_ptr.vmem [resolvable:$true] %s151
          %154 = dma.hbm_to_vmem [thread:$0]  %s150, 32, %s152, %s138
        $region24: #{tpu_custom_call.1} parent=19 // pred_fallthru
          _
      $region20: #{tpu_custom_call.1} parent=5 // pred_fallthru
        _
      %p155 = scmp.le.s32.totalorder 1, %s14
      %p156 = scmp.lt.s32.totalorder %s14, 3
      %p157 = pnand %p155, %p156
      %p158 = pneg %p157
      // Predicated region
      $region25: #{tpu_custom_call.1} parent=5 // pred_check
        _
      $region26: #{tpu_custom_call.1} parent=5 // pred_check_branch
        %160 = sbr.rel (%p157) target = $region28
      $region27: #{tpu_custom_call.1} parent=5 // pred_region
        %s161 = ssub.s32 %s14, 1
        %s162 = sand.u32 %s41, 1
        %s163 = scalar_lea.sflag [#allocation3], %s162
        %s164 = sand.u32 %s41, 1
        %s165 = smul.addr %s164, 2
        %s166 = scalar_lea.vmem [#allocation2], %s165
        // Predicated region
        $region29: #{tpu_custom_call.1} parent=27 // pred_check
          %p167 = pneg %p54
        $region30: #{tpu_custom_call.1} parent=27 // pred_check_branch
          %169 = sbr.rel (%p167) target = $region32
        $region31: #{tpu_custom_call.1} parent=27 // pred_region
          %171 = dma.done %s163, 32
        $region32: #{tpu_custom_call.1} parent=27 // pred_fallthru
          _
        %s172 = sand.u32 %s41, 1
        %s173 = scalar_lea.sflag [#allocation3], %s172
        %s174 = sand.u32 %s41, 1
        %s175 = smul.addr %s174, 2
        %s176 = scalar_lea.vmem [#allocation2], %s175
        %p177 = pneg %p54
        %p178 = pneg %p51
        %p179 = scmp.lt.s32.totalorder %s23, 0
        %s180 = scalar_select %p179, %s23, 0
        %s181 = smul.addr %s180, 2
        %s182 = scalar_lea.vmem %s1, %s181
        %p183 = pneg %p80
        %p184 = pneg %p77
        %p185 = pneg %p108
        %p186 = pneg %p105
        %s187 = sand.u32 %s95, 1
        %s188 = scalar_lea.sflag [#allocation4], %s187
        %s189 = sand.u32 %s95, 1
        %s190 = smul.addr %s189, 2
        %s191 = scalar_lea.vmem [#allocation5], %s190
        %p192 = scmp.lt.s32.totalorder %s23, 0
        %s193 = scalar_select %p192, %s23, 0
        %s194 = smul.addr %s193, 2
        %s195 = scalar_lea.vmem %s1, %s194
        %v196 = vld [vmem:[%s166] sm:$0x3]
        %v197 = vld [vmem:[%s195] sm:$0x3]
        %v198 = vadd.f32 %v196, %v197
        %v199 = vlaneseq
        %vm200 = vcmp.ge.s32.totalorder %v199, 0
        %vm201 = vcmp.lt.s32.totalorder %v199, 256
        %vm202 = vmand %vm200, %vm201
        %203 = vst.msk [vmem:[%s191] sm:$0x3] %vm202, %v198
        %s204 = sand.u32 %s95, 1
        %s205 = scalar_lea.sflag [#allocation4], %s204
        %s206 = sand.u32 %s95, 1
        %s207 = smul.addr %s206, 2
        %s208 = scalar_lea.vmem [#allocation5], %s207
        // Predicated region
        $region33: #{tpu_custom_call.1} parent=27 // pred_check
          %p209 = pneg %p105
        $region34: #{tpu_custom_call.1} parent=27 // pred_check_branch
          %211 = sbr.rel (%p209) target = $region36
        $region35: #{tpu_custom_call.1} parent=27 // pred_region
          %213 = vsyncadd %s205, 0
          %s214 = smul.addr %s23, 2
          %s215 = smul.addr %s24, 2
          %s216 = sadd.s32 %s214, %s215
          %s217 = scalar_lea.hbm %s2, %s216
          %s219 = sshll.u32 %s208, 4
          %s220 = int_to_ptr.vmem [resolvable:$true] %s219
          %s221 = sshll.u32 %s217, 4
          %s222 = int_to_ptr.hbm [resolvable:$true] %s221
          %224 = dma.vmem_to_hbm [thread:$0]  %s220, 32, %s222, %s205
        $region36: #{tpu_custom_call.1} parent=27 // pred_fallthru
          _
      $region28: #{tpu_custom_call.1} parent=5 // pred_fallthru
        _
      %p225 = scmp.le.s32.totalorder 2, %s14
      // Predicated region
      $region37: #{tpu_custom_call.1} parent=5 // pred_check
        %p226 = pneg %p225
      $region38: #{tpu_custom_call.1} parent=5 // pred_check_branch
        %228 = sbr.rel (%p226) target = $region40
      $region39: #{tpu_custom_call.1} parent=5 // pred_region
        %s229 = ssub.s32 %s14, 2
        // Predicated region
        $region41: #{tpu_custom_call.1} parent=39 // pred_check
          %p230 = pneg %p111
        $region42: #{tpu_custom_call.1} parent=39 // pred_check_branch
          %232 = sbr.rel (%p230) target = $region44
        $region43: #{tpu_custom_call.1} parent=39 // pred_region
          %s233 = sand.u32 %s96, 1
          %s234 = scalar_lea.sflag [#allocation4], %s233
          %s235 = sand.u32 %s96, 1
          %s236 = smul.addr %s235, 2
          %s237 = scalar_lea.vmem [#allocation5], %s236
          %239 = dma.done %s234, 32
        $region44: #{tpu_custom_call.1} parent=39 // pred_fallthru
          _
      $region40: #{tpu_custom_call.1} parent=5 // pred_fallthru
        _
    $region6: #{tpu_custom_call.1} parent=1 // loop_footer
      %s18 = sadd.s32 1, %s14
    $region7: #{tpu_custom_call.1} parent=1 // loop_footer_branch
      %13 = sbr.rel target = $region3
    $region8: #{tpu_custom_call.1} parent=1 // loop_exit
      _
    %240 = vsyncpa [#allocation3], 1
    %s241 = scalar_lea.sflag [#allocation3], 1
    %242 = vsyncpa %s241, 1
    %243 = vsyncpa [#allocation4], 1
    %s244 = scalar_lea.sflag [#allocation4], 1
    %245 = vsyncpa %s244, 1

</llo_original>
